<compile_context>
chip_gen: v7x
topology: tpu7x:2x2x1
jax: 0.10.0
libtpu: 0.0.40
codegen_flags: <defaults>
</compile_context>

<pallas_src>
import functools

import jax
import jax.numpy as jnp
from jax.experimental import pallas as pl
from jax.experimental.pallas import tpu as pltpu


def _linear_kernel(x_ref, w_ref, b_ref, o_ref, *, out_dim):
    # x_ref: (tile_b, in_dim)   VMEM, pipelined over the batch grid axis
    # w_ref: (in_dim, n_pad)    VMEM, resident (lane-padded to 128 for the MXU)
    # b_ref: (1, out_dim)       VMEM, resident
    # o_ref: (tile_b, out_dim)  VMEM; HBM writeback is the small un-padded stream
    acc = jnp.dot(x_ref[...], w_ref[...], preferred_element_type=jnp.float32)
    o_ref[...] = (acc[:, :out_dim] + b_ref[...]).astype(o_ref.dtype)


def _round_up(x, m):
    return -(-x // m) * m


def _pick_tile_b(B, in_dim, out_dim, n_pad, *, vmem_budget=12 * 1024 * 1024,
                 min_steps=4):
    """Pick a batch tile: multiple of 8, >= min_steps grid steps when B allows
    (>= 2 pipelined steps per TensorCore on v7x megacore), and double-buffered
    x/out tiles + resident padded W^T well under the smallest scoped-VMEM
    default on any generation."""
    if B <= 8:
        return B  # single full-array block (block dim == array dim is legal)

    def fits(t):
        # 2x double-buffered x tile + 2x double-buffered out tile
        # + resident padded W^T + bias, all f32 (worst case).
        return (2 * t * in_dim + 2 * t * out_dim + in_dim * n_pad + n_pad) * 4 \
            <= vmem_budget

    for t in (4096, 2048, 1024, 512, 256, 128, 64, 32, 16, 8):
        if B >= min_steps * t and fits(t):
            return t
    return 8


def logistic_regression_forward(x, weight, bias, *, tile_b=None,
                                use_bf16_inputs=False):
    """out = x @ weight.T + bias, computed in a Pallas TPU kernel.

    x:      (B, input_dim) float32
    weight: (output_dim, input_dim) float32   (PyTorch nn.Linear convention)
    bias:   (output_dim,) float32
    returns (B, output_dim) float32
    """
    B, in_dim = x.shape
    out_dim, in_dim_w = weight.shape
    assert in_dim == in_dim_w

    # ---- lane padding of W^T lives only in VMEM (MXU-friendly N) ----
    n_pad = _round_up(out_dim, 128)
    w_t = weight.T  # (in_dim, out_dim) -- tiny wrapper-side glue
    if n_pad != out_dim:
        w_t = jnp.pad(w_t, ((0, 0), (0, n_pad - out_dim)))
    b2 = bias.reshape(1, out_dim)

    if use_bf16_inputs:
        # Halves the dominant x HBM read stream on v6e/v7x; MXU accumulation
        # stays f32 via preferred_element_type in the kernel.
        x_in = x.astype(jnp.bfloat16)
        w_in = w_t.astype(jnp.bfloat16)
    else:
        x_in = x
        w_in = w_t

    # ---- batch tiling (software-pipelined x HBM stream, no batch padding) ----
    if tile_b is None:
        tile_b = _pick_tile_b(B, in_dim, out_dim, n_pad)

    grid = (pl.cdiv(B, tile_b),)  # tail block masked by Pallas, no wrapper pad/slice

    cost = pl.CostEstimate(
        flops=2 * B * in_dim * out_dim,
        transcendentals=0,
        bytes_accessed=(x_in.size * x_in.dtype.itemsize
                        + w_in.size * w_in.dtype.itemsize
                        + b2.size * b2.dtype.itemsize
                        + B * out_dim * x.dtype.itemsize),
    )

    kernel = functools.partial(_linear_kernel, out_dim=out_dim)

    return pl.pallas_call(
        kernel,
        out_shape=jax.ShapeDtypeStruct((B, out_dim), x.dtype),
        grid_spec=pltpu.PrefetchScalarGridSpec(
            num_scalar_prefetch=0,
            grid=grid,
            in_specs=[
                pl.BlockSpec((tile_b, in_dim), lambda i: (i, 0)),  # x tile (pipelined)
                pl.BlockSpec((in_dim, n_pad), lambda i: (0, 0)),   # padded W^T (resident)
                pl.BlockSpec((1, out_dim), lambda i: (0, 0)),      # bias (resident)
            ],
            out_specs=pl.BlockSpec((tile_b, out_dim), lambda i: (i, 0)),
        ),
        compiler_params=pltpu.CompilerParams(
            dimension_semantics=("parallel",)),  # batch axis -> megacore shardable
        cost_estimate=cost,
    )(x_in, w_in, b2)


if __name__ == "__main__":
    input_dim, output_dim = 128, 16

    key = jax.random.PRNGKey(0)
    kx1, kx2, kw, kb = jax.random.split(key, 4)

    # Deterministic parameter init (mimics nn.Linear's uniform(-1/sqrt(in), 1/sqrt(in)))
    bound = 1.0 / jnp.sqrt(jnp.float32(input_dim))
    weight = jax.random.uniform(kw, (output_dim, input_dim), jnp.float32, -bound, bound)
    bias = jax.random.uniform(kb, (output_dim,), jnp.float32, -bound, bound)

    # Case 1: small batch -> single full-array block.
    x1 = jax.random.normal(kx1, (8, input_dim), jnp.float32)
    out1 = jax.block_until_ready(logistic_regression_forward(x1, weight, bias))
    ref1 = x1 @ weight.T + bias
    assert out1.shape == (8, output_dim)
    assert jnp.allclose(out1, ref1, atol=1e-4, rtol=1e-4)

    # Case 2: non-divisible batch -> multi-step pipelined grid with a masked
    # tail block (no wrapper batch-pad copy or output-slice HBM passes).
    x2 = jax.random.normal(kx2, (200, input_dim), jnp.float32)
    out2 = jax.block_until_ready(logistic_regression_forward(x2, weight, bias))
    ref2 = x2 @ weight.T + bias
    assert out2.shape == (200, output_dim)
    assert jnp.allclose(out2, ref2, atol=1e-4, rtol=1e-4)

    # Case 3: opt-in bf16 input stream (f32 accumulation), looser tolerance.
    out3 = jax.block_until_ready(
        logistic_regression_forward(x2, weight, bias, use_bf16_inputs=True))
    assert out3.shape == (200, output_dim)
    assert jnp.allclose(out3, ref2, atol=5e-2, rtol=5e-2)

    print("KERNEL_OK")
</pallas_src>

<mosaic_0001>
module attributes {stable_mosaic.version = 11 : i64} {
  func.func @_linear_kernel(%arg0: i32, %arg1: memref<8x128xf32, #tpu.memory_space<vmem>>, %arg2: memref<128x128xf32, #tpu.memory_space<vmem>>, %arg3: memref<1x16xf32, #tpu.memory_space<vmem>>, %arg4: memref<8x16xf32, #tpu.memory_space<vmem>>) attributes {dimension_semantics = [#tpu.dimension_semantics<parallel>], iteration_bounds = array<i64: 1>, scalar_prefetch = 0 : i64, scratch_operands = 0 : i64, tpu.core_type = #tpu.core_type<tc>, window_params = [{transform_indices = @transform_0, window_bounds = array<i64: 8, 128>}, {pipeline_mode = #tpu.pipeline_mode<synchronous>, transform_indices = @transform_1, window_bounds = array<i64: 128, 128>}, {pipeline_mode = #tpu.pipeline_mode<synchronous>, transform_indices = @transform_2, window_bounds = array<i64: 1, 16>}, {transform_indices = @transform_3, window_bounds = array<i64: 8, 16>}]} {
    %c0 = arith.constant 0 : index
    %c0_0 = arith.constant 0 : index
    %0 = vector.load %arg1[%c0, %c0_0] : memref<8x128xf32, #tpu.memory_space<vmem>>, vector<8x128xf32>
    %c0_1 = arith.constant 0 : index
    %c0_2 = arith.constant 0 : index
    %1 = vector.load %arg2[%c0_1, %c0_2] : memref<128x128xf32, #tpu.memory_space<vmem>>, vector<128x128xf32>
    %cst = arith.constant dense<0.000000e+00> : vector<8x128xf32>
    %2 = tpu.matmul %0, %1, %cst {dimension_numbers = #tpu.dot_dimension_numbers<[1], [0], [0], [1], [0, 0, 1, 1], [], []>} : vector<8x128xf32>, vector<128x128xf32>, vector<8x128xf32> -> vector<8x128xf32>
    %3 = vector.extract_strided_slice %2 {offsets = [0, 0], sizes = [8, 16], strides = [1, 1]} : vector<8x128xf32> to vector<8x16xf32>
    %c0_3 = arith.constant 0 : index
    %c0_4 = arith.constant 0 : index
    %4 = vector.load %arg3[%c0_3, %c0_4] : memref<1x16xf32, #tpu.memory_space<vmem>>, vector<1x16xf32>
    %5 = vector.broadcast %4 : vector<1x16xf32> to vector<8x16xf32>
    %6 = arith.addf %3, %5 : vector<8x16xf32>
    %c0_5 = arith.constant 0 : index
    %c0_6 = arith.constant 0 : index
    %7 = vector.load %arg4[%c0_5, %c0_6] : memref<8x16xf32, #tpu.memory_space<vmem>>, vector<8x16xf32>
    tpu.vector_store %arg4[%c0_5, %c0_6], %6 {strides = array<i32>} : memref<8x16xf32, #tpu.memory_space<vmem>>, vector<8x16xf32>,
    return
  }
  func.func @transform_0(%arg0: i32) -> (i32, i32) {
    %c0_i32 = arith.constant 0 : i32
    %c0_i32_0 = arith.constant 0 : i32
    return %arg0, %c0_i32 : i32, i32
  }
  func.func @transform_1(%arg0: i32) -> (i32, i32) {
    %c0_i32 = arith.constant 0 : i32
    %c0_i32_0 = arith.constant 0 : i32
    %c0_i32_1 = arith.constant 0 : i32
    return %c0_i32, %c0_i32_0 : i32, i32
  }
  func.func @transform_2(%arg0: i32) -> (i32, i32) {
    %c0_i32 = arith.constant 0 : i32
    %c0_i32_0 = arith.constant 0 : i32
    %c0_i32_1 = arith.constant 0 : i32
    return %c0_i32, %c0_i32_0 : i32, i32
  }
  func.func @transform_3(%arg0: i32) -> (i32, i32) {
    %c0_i32 = arith.constant 0 : i32
    %c0_i32_0 = arith.constant 0 : i32
    return %arg0, %c0_i32 : i32, i32
  }
}

</mosaic_0001>

<llo_original>
// kernel: tpu_custom_call.1
$region0: #{tpu_custom_call.1}
  #allocation0 [shape = 'u32[]', space=smem, size = 0x4, offset = 0x4, fixed_abs, tag = 'smem constant byte address 0x4 - core index']
  #allocation1 [shape = 'u32[144,128]{1,0:T(1,128)}', space=vmem, size = 0x12000, scoped, tag = 'internal scratch']
  %s0 = inlined_call_operand.hbm [shape: f32[8,128], index: 0, kind: input, shape index: {}]
  %s1 = inlined_call_operand.hbm [shape: f32[128,128], index: 1, kind: input, shape index: {}]
  %s2 = inlined_call_operand.vmem [shape: f32[1,16], index: 2, kind: input, shape index: {}]
  %s3 = inlined_call_operand.hbm [shape: f32[8,16], index: 3, kind: output, shape index: {}]
  %s4 = sld [smem:[#allocation0]]
  $region30: #{tpu_custom_call.1} parent=0
    _
  %s6 = ssub.s32 1, %s4
  %s7 = scalar_select 0, %s6, %s4
  $region1: #{tpu_custom_call.1} parent=0
    #allocation2 [shape = 'u8[4096]{0}', space=vmem, size = 0x1000, scoped, tag = 'input window, operand 0, single buffered']
    #allocation3 [shape = 's32[1]{0}', space=sflag, size = 0x4, scoped, tag = 'scoped memory for tpu_custom_call.1']
    #allocation4 [shape = 's32[1]{0}', space=sflag, size = 0x4, scoped, tag = 'scoped memory for tpu_custom_call.1']
    #allocation5 [shape = 'u8[65536]{0}', space=vmem, size = 0x10000, scoped, tag = 'input window, operand 1, single buffered']
    #allocation6 [shape = 's32[1]{0}', space=sflag, size = 0x4, scoped, tag = 'scoped memory for tpu_custom_call.1']
    #allocation7 [shape = 'u8[4096]{0}', space=vmem, size = 0x1000, scoped, tag = 'output window, operand 0, single buffered']
    %8 = vsyncpa [#allocation3], 0
    %9 = vsyncpa [#allocation6], 0
    %10 = vsyncpa [#allocation4], 0
    // Predicated region
    $region2: #{tpu_custom_call.1} parent=1 // pred_check
      _
    $region3: #{tpu_custom_call.1} parent=1 // pred_check_branch
      %12 = sbr.rel (0) target = $region5
    $region4: #{tpu_custom_call.1} parent=1 // pred_region
      %s14 = ssub.s32 128, 128
      %15 = vsyncadd [#allocation3], %s14
      %s17 = sshll.u32 [#allocation2], 4
      %s18 = int_to_ptr.vmem [resolvable:$true] %s17
      %20 = dma.hbm_to_vmem [thread:$0]  %s0, 128, %s18, [#allocation3]
    $region5: #{tpu_custom_call.1} parent=1 // pred_fallthru
      _
    // Predicated region
    $region6: #{tpu_custom_call.1} parent=1 // pred_check
      _
    $region7: #{tpu_custom_call.1} parent=1 // pred_check_branch
      %22 = sbr.rel (0) target = $region9
    $region8: #{tpu_custom_call.1} parent=1 // pred_region
      %s24 = ssub.s32 2048, 2048
      %25 = vsyncadd [#allocation6], %s24
      %s26 = sshll.u32 [#allocation5], 4
      %s27 = int_to_ptr.vmem [resolvable:$true] %s26
      %32 = dma.hbm_to_vmem [thread:$0]  %s1, 2048, %s27, [#allocation6], 128, 128, 8
    $region9: #{tpu_custom_call.1} parent=1 // pred_fallthru
      _
    // Predicated region
    $region10: #{tpu_custom_call.1} parent=1 // pred_check
      _
    $region11: #{tpu_custom_call.1} parent=1 // pred_check_branch
      %34 = sbr.rel (0) target = $region13
    $region12: #{tpu_custom_call.1} parent=1 // pred_region
      _
    $region13: #{tpu_custom_call.1} parent=1 // pred_fallthru
      _
    // Predicated region
    $region14: #{tpu_custom_call.1} parent=1 // pred_check
      _
    $region15: #{tpu_custom_call.1} parent=1 // pred_check_branch
      %36 = sbr.rel (0) target = $region17
    $region16: #{tpu_custom_call.1} parent=1 // pred_region
      %37 = dma.done [#allocation3], 128
    $region17: #{tpu_custom_call.1} parent=1 // pred_fallthru
      _
    // Predicated region
    $region18: #{tpu_custom_call.1} parent=1 // pred_check
      _
    $region19: #{tpu_custom_call.1} parent=1 // pred_check_branch
      %39 = sbr.rel (0) target = $region21
    $region20: #{tpu_custom_call.1} parent=1 // pred_region
      %40 = dma.done [#allocation6], 2048
    $region21: #{tpu_custom_call.1} parent=1 // pred_fallthru
      _
    %v41 = vld [vmem:[#allocation2] sm:$0xff]
    %v42 = vld [vmem:[#allocation5] sm:$0xff]
    %v43 = vld [vmem:[#allocation5 + $0x8] sm:$0xff]
    %v44 = vld [vmem:[#allocation5 + $0x10] sm:$0xff]
    %v45 = vld [vmem:[#allocation5 + $0x18] sm:$0xff]
    %v46 = vld [vmem:[#allocation5 + $0x20] sm:$0xff]
    %v47 = vld [vmem:[#allocation5 + $0x28] sm:$0xff]
    %v48 = vld [vmem:[#allocation5 + $0x30] sm:$0xff]
    %v49 = vld [vmem:[#allocation5 + $0x38] sm:$0xff]
    %v50 = vld [vmem:[#allocation5 + $0x40] sm:$0xff]
    %v51 = vld [vmem:[#allocation5 + $0x48] sm:$0xff]
    %v52 = vld [vmem:[#allocation5 + $0x50] sm:$0xff]
    %v53 = vld [vmem:[#allocation5 + $0x58] sm:$0xff]
    %v54 = vld [vmem:[#allocation5 + $0x60] sm:$0xff]
    %v55 = vld [vmem:[#allocation5 + $0x68] sm:$0xff]
    %v56 = vld [vmem:[#allocation5 + $0x70] sm:$0xff]
    %v57 = vld [vmem:[#allocation5 + $0x78] sm:$0xff]
    %58 = vmatprep.subr.mxu0 0.0
    %59 = vmatpush1.msra.mxu0 %v42
    %60 = vmatprep.subr.mxu0 0.0
    %61 = vmatpush1.msra.mxu0 %v43
    %62 = vmatprep.subr.mxu0 0.0
    %63 = vmatpush1.msra.mxu0 %v44
    %64 = vmatprep.subr.mxu0 0.0
    %65 = vmatpush1.msra.mxu0 %v45
    %66 = vmatprep.subr.mxu0 0.0
    %67 = vmatpush1.msra.mxu0 %v46
    %68 = vmatprep.subr.mxu0 0.0
    %69 = vmatpush1.msra.mxu0 %v47
    %70 = vmatprep.subr.mxu0 0.0
    %71 = vmatpush1.msra.mxu0 %v48
    %72 = vmatprep.subr.mxu0 0.0
    %73 = vmatpush1.msra.mxu0 %v49
    %74 = vmatprep.subr.mxu0 0.0
    %75 = vmatpush1.msra.mxu0 %v50
    %76 = vmatprep.subr.mxu0 0.0
    %77 = vmatpush1.msra.mxu0 %v51
    %78 = vmatprep.subr.mxu0 0.0
    %79 = vmatpush1.msra.mxu0 %v52
    %80 = vmatprep.subr.mxu0 0.0
    %81 = vmatpush1.msra.mxu0 %v53
    %82 = vmatprep.subr.mxu0 0.0
    %83 = vmatpush1.msra.mxu0 %v54
    %84 = vmatprep.subr.mxu0 0.0
    %85 = vmatpush1.msra.mxu0 %v55
    %86 = vmatprep.subr.mxu0 0.0
    %87 = vmatpush1.msra.mxu0 %v56
    %88 = vmatprep.subr.mxu0 0.0
    %89 = vmatpush1.msra.mxu0 %v57
    %90 = vmatprep.subr.mxu0 0.0
    %91 = vmatpush1.msra.mxu0 0.0
    %92 = vmatprep.subr.mxu0 0.0
    %93 = vmatpush1.msra.mxu0 0.0
    %94 = vmatprep.subr.mxu0 0.0
    %95 = vmatpush1.msra.mxu0 0.0
    %96 = vmatprep.subr.mxu0 0.0
    %97 = vmatpush1.msra.mxu0 0.0
    %98 = vmatprep.subr.mxu0 0.0
    %99 = vmatpush1.msra.mxu0 0.0
    %100 = vmatprep.subr.mxu0 0.0
    %101 = vmatpush1.msra.mxu0 0.0
    %102 = vmatprep.subr.mxu0 0.0
    %103 = vmatpush1.msra.mxu0 0.0
    %104 = vmatprep.subr.mxu0 0.0
    %105 = vmatpush1.msra.mxu0 0.0
    %106 = vmatprep.subr.mxu0 0.0
    %107 = vmatpush1.msra.mxu0 0.0
    %108 = vmatprep.subr.mxu0 0.0
    %109 = vmatpush1.msra.mxu0 0.0
    %110 = vmatprep.subr.mxu0 0.0
    %111 = vmatpush1.msra.mxu0 0.0
    %112 = vmatprep.subr.mxu0 0.0
    %113 = vmatpush1.msra.mxu0 0.0
    %114 = vmatprep.subr.mxu0 0.0
    %115 = vmatpush1.msra.mxu0 0.0
    %116 = vmatprep.subr.mxu0 0.0
    %117 = vmatpush1.msra.mxu0 0.0
    %118 = vmatprep.subr.mxu0 0.0
    %119 = vmatpush1.msra.mxu0 0.0
    %120 = vmatprep.subr.mxu0 0.0
    %121 = vmatpush1.msra.mxu0 0.0
    %122 = vmatprep.mubr.f32.mxu0 0.0
    %123 = vmatmul.mubr.f32.gmra.mrb[0].mxu0 %v41
    %v124 = vpop.f32.mrb[0].mxu0
    %v125 = vadd.f32 0.0, %v124
    %v126 = vpop.f32.mrb[0].mxu0
    %127 = vdwg.mxu0
    %v128 = vld [vmem:[%s2] sm:$0x1]
    %v130 = vlaneseq
    %v131 = vshrl.u32 %v130, 7
    %v132 = vsub.s32 0, %v131
    %v133 = vrot.slane %v128, %v132
    %v135 = vadd.f32 %v125, %v133
    %vm136 = vcmask 130048
    %137 = vst.msk [vmem:[#allocation7] sm:$0xff] %vm136, %v135
    // Predicated region
    $region22: #{tpu_custom_call.1} parent=1 // pred_check
      _
    $region23: #{tpu_custom_call.1} parent=1 // pred_check_branch
      %139 = sbr.rel (0) target = $region25
    $region24: #{tpu_custom_call.1} parent=1 // pred_region
      %s141 = ssub.s32 128, 128
      %142 = vsyncadd [#allocation4], %s141
      %s144 = sshll.u32 [#allocation7], 4
      %s145 = int_to_ptr.vmem [resolvable:$true] %s144
      %147 = dma.vmem_to_hbm [thread:$0]  %s145, 128, %s3, [#allocation4]
    $region25: #{tpu_custom_call.1} parent=1 // pred_fallthru
      _
    // Predicated region
    $region26: #{tpu_custom_call.1} parent=1 // pred_check
      _
    $region27: #{tpu_custom_call.1} parent=1 // pred_check_branch
      %149 = sbr.rel (0) target = $region29
    $region28: #{tpu_custom_call.1} parent=1 // pred_region
      %150 = dma.done [#allocation4], 128
    $region29: #{tpu_custom_call.1} parent=1 // pred_fallthru
      _
    %151 = vsyncpa [#allocation3], 1
    %152 = vsyncpa [#allocation6], 1
    %153 = vsyncpa [#allocation4], 1

</llo_original>
